<compile_context>
chip_gen: v7x
topology: tpu7x:2x2x1
jax: 0.10.0
libtpu: 0.0.40
codegen_flags: <defaults>
</compile_context>

<pallas_src>
import functools

import jax
import jax.numpy as jnp
from jax import lax
from jax.experimental import pallas as pl
from jax.experimental.pallas import tpu as pltpu

H = 128    # GRU hidden size
F1 = 64    # fc1 out features
F1P = 128  # fc1 features padded to a full lane (zero-padded -> numerically exact)


def _round_up(x, m):
    return (x + m - 1) // m * m


def _sigmoid(x):
    # sigmoid(x) = 0.5 * tanh(x/2) + 0.5 : one EUP op, no VALU divide.
    return 0.5 * jnp.tanh(0.5 * x) + 0.5


def gru_head_kernel(x_ref, w_ih_ref, b_g_ref, w_hh_ref, b_hn_ref,
                    w1_ref, b1_ref, w2_ref, b2_ref,
                    out_ref, h_ref, gx_ref,
                    *, seq_len, t_chunk, n_chains):
    """One (batch block, time chunk) grid step.

    x_ref  : (Tc, Bb, D)  raw input chunk (time-major).
    gx_ref : (Tc, Bb, 3H) VMEM scratch for this chunk's input projection.
    h_ref  : (Bb, H)      VMEM scratch carrying h across time chunks.
    PyTorch gate layout along 3H is [r | z | n]; b_ih and the r/z part of b_hh
    are folded into b_g (added to gx); the n-gate hidden bias (b_hn) stays in
    the recurrence because it is multiplied by r.
    """
    t_idx = pl.program_id(1)
    n_chunks = pl.num_programs(1)
    Bb = h_ref.shape[0]
    D = x_ref.shape[-1]

    @pl.when(t_idx == 0)
    def _init():
        h_ref[...] = jnp.zeros_like(h_ref)

    # ---- input projection for this chunk: one batched MXU matmul ----
    x_flat = x_ref[...].reshape(t_chunk * Bb, D)
    gx = jnp.dot(x_flat, w_ih_ref[...], preferred_element_type=jnp.float32)
    gx_ref[...] = (gx + b_g_ref[...]).reshape(t_chunk, Bb, 3 * H)

    # Valid timesteps in this chunk (last chunk may be partial; the padded
    # timesteps were zero-filled in the wrapper and are simply never visited).
    steps = jnp.minimum(t_chunk, seq_len - t_idx * t_chunk)

    # Hoist loop-invariant loads / broadcasts (JAX does not CSE broadcast_in_dim).
    w_hh = w_hh_ref[...]                                  # (H, 3H), bf16
    b_hn = jnp.broadcast_to(b_hn_ref[...], (Bb, H))       # (Bb, H)

    def gates(gx_t, gh, h, b_hn_c):
        r = _sigmoid(gx_t[:, 0:H] + gh[:, 0:H])
        z = _sigmoid(gx_t[:, H:2 * H] + gh[:, H:2 * H])
        n = jnp.tanh(gx_t[:, 2 * H:] + r * (gh[:, 2 * H:] + b_hn_c))
        return (1.0 - z) * n + z * h

    if n_chains == 2:
        # Two independent batch sub-chains: chain A's gate math (VPU/EUP)
        # overlaps chain B's matmul (MXU) on the serial critical path.
        half = Bb // 2
        b_hn_a, b_hn_b = b_hn[:half], b_hn[half:]

        def step(t, carry):
            h_a, h_b = carry
            gx_t = gx_ref[t]                               # (Bb, 3H)
            gh_a = jnp.dot(h_a.astype(jnp.bfloat16), w_hh,
                           preferred_element_type=jnp.float32)
            gh_b = jnp.dot(h_b.astype(jnp.bfloat16), w_hh,
                           preferred_element_type=jnp.float32)
            h_a = gates(gx_t[:half], gh_a, h_a, b_hn_a)
            h_b = gates(gx_t[half:], gh_b, h_b, b_hn_b)
            return (h_a, h_b)

        h0 = h_ref[...]
        h_a, h_b = lax.fori_loop(0, steps, step, (h0[:half], h0[half:]))
        h_ref[0:half, :] = h_a
        h_ref[half:Bb, :] = h_b
    else:
        def step(t, h):
            gx_t = gx_ref[t]                               # (Bb, 3H)
            gh = jnp.dot(h.astype(jnp.bfloat16), w_hh,
                         preferred_element_type=jnp.float32)
            return gates(gx_t, gh, h, b_hn)

        h_ref[...] = lax.fori_loop(0, steps, step, h_ref[...])

    # ---- head: fc1 -> ReLU -> (dropout = identity in eval) -> fc2 -> sigmoid ----
    @pl.when(t_idx == n_chunks - 1)
    def _head():
        h_last = h_ref[...]
        h1 = jnp.maximum(
            jnp.dot(h_last, w1_ref[...], preferred_element_type=jnp.float32)
            + b1_ref[...], 0.0)                            # (Bb, F1P)
        # fc2 has a single output feature: VPU multiply + lane reduce (padded
        # columns of w2 are zero so they contribute nothing).
        logits = jnp.sum(h1 * w2_ref[...], axis=-1, keepdims=True) + b2_ref[0, 0]
        out_ref[...] = _sigmoid(logits)


@functools.partial(jax.jit, static_argnames=("tc", "n_batch_blocks"))
def gru_forward(x, params, *, tc=None, n_batch_blocks=None):
    """x: (B, T, D) float32 (batch_first, like nn.GRU(batch_first=True)).
    Returns (B, 1) float32 in [0, 1].

    tc             : time-chunk size (None = auto, sized for a few MiB of VMEM).
    n_batch_blocks : number of batch blocks (None = 1 block per <=128 rows;
                     set 2 on v7x to feed both TensorCores)."""
    B, T, D = x.shape

    # ---- parameter prep (plain XLA, negligible) ----
    w_ih = params["weight_ih_l0"].T.astype(jnp.float32)            # (D, 3H)
    w_hh = params["weight_hh_l0"].T.astype(jnp.bfloat16)           # (H, 3H) bf16 MXU operand
    b_ih = params["bias_ih_l0"]
    b_hh = params["bias_hh_l0"]
    # Fold b_ih fully and the r/z part of b_hh into the input projection; the
    # n-gate hidden bias must stay inside the recurrence (multiplied by r).
    b_g = (b_ih + jnp.concatenate([b_hh[:2 * H], jnp.zeros((H,), jnp.float32)])
           ).reshape(1, 3 * H)
    b_hn = b_hh[2 * H:].reshape(1, H)

    w1 = jnp.zeros((H, F1P), jnp.float32).at[:, :F1].set(params["fc1_weight"].T)
    b1 = jnp.zeros((1, F1P), jnp.float32).at[:, :F1].set(params["fc1_bias"])
    w2 = jnp.zeros((1, F1P), jnp.float32).at[:, :F1].set(
        params["fc2_weight"].reshape(1, F1))
    b2 = params["fc2_bias"].reshape(1, 1)                          # scalar -> SMEM

    # ---- batch blocking ----
    B_pad0 = max(_round_up(B, 8), 8)
    if n_batch_blocks is None:
        # Default: one block per 128 rows.  Splitting the latency-bound serial
        # recurrence only pays off when blocks land on different TensorCores.
        n_batch_blocks = pl.cdiv(B_pad0, 128)
    Bb = _round_up(pl.cdiv(B_pad0, n_batch_blocks), 8)
    if Bb >= 16:
        Bb = _round_up(Bb, 16)          # keep sub-chain halves sublane-aligned
    B_pad = Bb * n_batch_blocks
    n_chains = 2 if Bb >= 16 else 1

    # ---- time chunking (keeps gx scratch + streamed x at a few MiB) ----
    if tc is None:
        tc = max(8, ((6 << 20) // (Bb * (3 * H + 2 * D) * 4)) // 8 * 8)
    Tc = int(min(T, tc))
    n_chunks = pl.cdiv(T, Tc)
    T_pad = n_chunks * Tc

    # Time-major, zero-padded.  Padded timesteps are never executed (the kernel
    # bounds its loop with the true T); padded batch rows are sliced off below.
    x_tm = jnp.transpose(x.astype(jnp.float32), (1, 0, 2))          # (T, B, D)
    x_tm = jnp.pad(x_tm, ((0, T_pad - T), (0, B_pad - B), (0, 0)))

    # ---- explicit VMEM budget (don't rely on the per-generation default) ----
    vmem_needed = (
        Tc * Bb * 3 * H * 4                 # gx scratch
        + Bb * H * 4                        # h scratch
        + 2 * Tc * Bb * D * 4               # double-buffered x chunk
        + 2 * (D * 3 * H * 4 + 3 * H * 4 + H * 3 * H * 2 + H * 4
               + H * F1P * 4 + 2 * F1P * 4)  # (conservatively double-buffered) weights
        + 2 * Bb * 4                        # out block
    )
    vmem_limit = int(min(max(vmem_needed + (4 << 20), 16 << 20), 100 << 20))

    kernel = functools.partial(gru_head_kernel,
                               seq_len=T, t_chunk=Tc, n_chains=n_chains)

    out = pl.pallas_call(
        kernel,
        out_shape=jax.ShapeDtypeStruct((B_pad, 1), jnp.float32),
        grid=(n_batch_blocks, n_chunks),
        in_specs=[
            pl.BlockSpec((Tc, Bb, D), lambda i, t: (t, i, 0)),      # x chunk (streamed)
            pl.BlockSpec((D, 3 * H), lambda i, t: (0, 0)),          # w_ih
            pl.BlockSpec((1, 3 * H), lambda i, t: (0, 0)),          # folded gate bias
            pl.BlockSpec((H, 3 * H), lambda i, t: (0, 0)),          # w_hh (bf16)
            pl.BlockSpec((1, H), lambda i, t: (0, 0)),              # n-gate hidden bias
            pl.BlockSpec((H, F1P), lambda i, t: (0, 0)),            # fc1 weight (padded)
            pl.BlockSpec((1, F1P), lambda i, t: (0, 0)),            # fc1 bias (padded)
            pl.BlockSpec((1, F1P), lambda i, t: (0, 0)),            # fc2 weight row (padded)
            pl.BlockSpec(memory_space=pltpu.MemorySpace.SMEM),      # fc2 bias scalar
        ],
        out_specs=pl.BlockSpec((Bb, 1), lambda i, t: (i, 0)),
        scratch_shapes=[
            pltpu.VMEM((Bb, H), jnp.float32),                       # h carry
            pltpu.VMEM((Tc, Bb, 3 * H), jnp.float32),               # chunk gx
        ],
        compiler_params=pltpu.CompilerParams(
            dimension_semantics=("parallel", "arbitrary"),
            vmem_limit_bytes=vmem_limit),
    )(x_tm, w_ih, b_g, w_hh, b_hn, w1, b1, w2, b2)

    return out[:B]


def init_params(key, input_size):
    """Deterministic synthetic parameters with PyTorch-native shapes."""
    ks = jax.random.split(key, 8)
    s = 1.0 / jnp.sqrt(H)
    u = lambda k, shape, scale: jax.random.uniform(k, shape, jnp.float32, -scale, scale)
    return {
        "weight_ih_l0": u(ks[0], (3 * H, input_size), s),
        "weight_hh_l0": u(ks[1], (3 * H, H), s),
        "bias_ih_l0":   u(ks[2], (3 * H,), s),
        "bias_hh_l0":   u(ks[3], (3 * H,), s),
        "fc1_weight":   u(ks[4], (F1, H), 1.0 / jnp.sqrt(H)),
        "fc1_bias":     u(ks[5], (F1,), 1.0 / jnp.sqrt(H)),
        "fc2_weight":   u(ks[6], (1, F1), 1.0 / jnp.sqrt(F1)),
        "fc2_bias":     u(ks[7], (1,), 1.0 / jnp.sqrt(F1)),
    }


def gru_forward_ref(x, params):
    """Pure-JAX f32 reference (lax.scan) mirroring torch.nn.GRU + head, eval mode."""
    B, T, D = x.shape
    w_ih, w_hh = params["weight_ih_l0"].T, params["weight_hh_l0"].T
    b_ih, b_hh = params["bias_ih_l0"], params["bias_hh_l0"]

    def step(h, x_t):
        gx = x_t @ w_ih + b_ih
        gh = h @ w_hh + b_hh
        r = jax.nn.sigmoid(gx[:, :H] + gh[:, :H])
        z = jax.nn.sigmoid(gx[:, H:2 * H] + gh[:, H:2 * H])
        n = jnp.tanh(gx[:, 2 * H:] + r * gh[:, 2 * H:])
        h = (1.0 - z) * n + z * h
        return h, None

    h0 = jnp.zeros((B, H), jnp.float32)
    h_last, _ = lax.scan(step, h0, jnp.transpose(x, (1, 0, 2)))
    h1 = jnp.maximum(h_last @ params["fc1_weight"].T + params["fc1_bias"], 0.0)
    return jax.nn.sigmoid(h1 @ params["fc2_weight"].T + params["fc2_bias"])


if __name__ == "__main__":
    key = jax.random.PRNGKey(0)
    kx, kp, kx2 = jax.random.split(key, 3)

    # Small case: single time chunk, single batch block, single chain.
    B, T, D = 2, 8, 32
    x = jax.random.normal(kx, (B, T, D), jnp.float32)
    params = init_params(kp, D)
    out = jax.block_until_ready(gru_forward(x, params))
    ref = gru_forward_ref(x, params)
    assert out.shape == (B, 1), out.shape
    # Tolerance loosened vs. pure f32 because the recurrence matmul uses bf16
    # MXU operands (f32 accumulate, f32 gate math / h carry).
    assert jnp.allclose(out, ref, atol=5e-3, rtol=5e-3), (out, ref)

    # Larger case: exercises T-chunking with a partial last chunk, two batch
    # blocks on the "parallel" axis, batch padding, and the 2-chain ILP path.
    B2, T2 = 24, 20
    x2 = jax.random.normal(kx2, (B2, T2, D), jnp.float32)
    out2 = jax.block_until_ready(gru_forward(x2, params, tc=8, n_batch_blocks=2))
    ref2 = gru_forward_ref(x2, params)
    assert out2.shape == (B2, 1), out2.shape
    assert jnp.allclose(out2, ref2, atol=5e-3, rtol=5e-3), (out2, ref2)

    print("KERNEL_OK")
</pallas_src>

<mosaic_0001>
module attributes {stable_mosaic.version = 11 : i64} {
  func.func @gru_head_kernel(%arg0: i32, %arg1: i32, %arg2: memref<8x8x32xf32, #tpu.memory_space<vmem>>, %arg3: memref<32x384xf32, #tpu.memory_space<vmem>>, %arg4: memref<1x384xf32, #tpu.memory_space<vmem>>, %arg5: memref<128x384xbf16, #tpu.memory_space<vmem>>, %arg6: memref<1x128xf32, #tpu.memory_space<vmem>>, %arg7: memref<128x128xf32, #tpu.memory_space<vmem>>, %arg8: memref<1x128xf32, #tpu.memory_space<vmem>>, %arg9: memref<1x128xf32, #tpu.memory_space<vmem>>, %arg10: memref<1x1xf32, #tpu.memory_space<smem>>, %arg11: memref<8x1xf32, #tpu.memory_space<vmem>>, %arg12: memref<8x128xf32, #tpu.memory_space<vmem>>, %arg13: memref<8x8x384xf32, #tpu.memory_space<vmem>>) attributes {dimension_semantics = [#tpu.dimension_semantics<parallel>, #tpu.dimension_semantics<arbitrary>], iteration_bounds = array<i64: 1, 1>, scalar_prefetch = 0 : i64, scratch_operands = 2 : i64, tpu.core_type = #tpu.core_type<tc>, window_params = [{transform_indices = @transform_0, window_bounds = array<i64: 8, 8, 32>}, {pipeline_mode = #tpu.pipeline_mode<synchronous>, transform_indices = @transform_1, window_bounds = array<i64: 32, 384>}, {pipeline_mode = #tpu.pipeline_mode<synchronous>, transform_indices = @transform_2, window_bounds = array<i64: 1, 384>}, {pipeline_mode = #tpu.pipeline_mode<synchronous>, transform_indices = @transform_3, window_bounds = array<i64: 128, 384>}, {pipeline_mode = #tpu.pipeline_mode<synchronous>, transform_indices = @transform_4, window_bounds = array<i64: 1, 128>}, {pipeline_mode = #tpu.pipeline_mode<synchronous>, transform_indices = @transform_5, window_bounds = array<i64: 128, 128>}, {pipeline_mode = #tpu.pipeline_mode<synchronous>, transform_indices = @transform_6, window_bounds = array<i64: 1, 128>}, {pipeline_mode = #tpu.pipeline_mode<synchronous>, transform_indices = @transform_7, window_bounds = array<i64: 1, 128>}, {transform_indices = @transform_8, window_bounds = array<i64: 1, 1>}, {transform_indices = @transform_9, window_bounds = array<i64: 8, 1>}]} {
    %c0_i32 = arith.constant 0 : i32
    %0 = arith.cmpi eq, %arg1, %c0_i32 : i32
    %1 = arith.extui %0 : i1 to i32
    %c0_i32_0 = arith.constant 0 : i32
    %2 = arith.cmpi ne, %1, %c0_i32_0 : i32
    scf.if %2 {
      %cst_23 = arith.constant 0.000000e+00 : f32
      %27 = vector.broadcast %cst_23 : f32 to vector<8x128xf32>
      %c0_24 = arith.constant 0 : index
      %c0_25 = arith.constant 0 : index
      %28 = vector.load %arg12[%c0_24, %c0_25] : memref<8x128xf32, #tpu.memory_space<vmem>>, vector<8x128xf32>
      tpu.vector_store %arg12[%c0_24, %c0_25], %27 {strides = array<i32>} : memref<8x128xf32, #tpu.memory_space<vmem>>, vector<8x128xf32>,
    } else {
    }
    %c0 = arith.constant 0 : index
    %c0_1 = arith.constant 0 : index
    %c0_2 = arith.constant 0 : index
    %3 = vector.load %arg2[%c0, %c0_1, %c0_2] : memref<8x8x32xf32, #tpu.memory_space<vmem>>, vector<8x8x32xf32>
    %4 = vector.shape_cast %3 : vector<8x8x32xf32> to vector<64x32xf32>
    %c0_3 = arith.constant 0 : index
    %c0_4 = arith.constant 0 : index
    %5 = vector.load %arg3[%c0_3, %c0_4] : memref<32x384xf32, #tpu.memory_space<vmem>>, vector<32x384xf32>
    %cst = arith.constant dense<0.000000e+00> : vector<64x384xf32>
    %6 = tpu.matmul %4, %5, %cst {dimension_numbers = #tpu.dot_dimension_numbers<[1], [0], [0], [1], [0, 0, 1, 1], [], []>} : vector<64x32xf32>, vector<32x384xf32>, vector<64x384xf32> -> vector<64x384xf32>
    %c0_5 = arith.constant 0 : index
    %c0_6 = arith.constant 0 : index
    %7 = vector.load %arg4[%c0_5, %c0_6] : memref<1x384xf32, #tpu.memory_space<vmem>>, vector<1x384xf32>
    %8 = vector.broadcast %7 : vector<1x384xf32> to vector<64x384xf32>
    %9 = arith.addf %6, %8 : vector<64x384xf32>
    %10 = vector.shape_cast %9 : vector<64x384xf32> to vector<8x8x384xf32>
    %c0_7 = arith.constant 0 : index
    %c0_8 = arith.constant 0 : index
    %c0_9 = arith.constant 0 : index
    %11 = vector.load %arg13[%c0_7, %c0_8, %c0_9] : memref<8x8x384xf32, #tpu.memory_space<vmem>>, vector<8x8x384xf32>
    tpu.vector_store %arg13[%c0_7, %c0_8, %c0_9], %10 {strides = array<i32>} : memref<8x8x384xf32, #tpu.memory_space<vmem>>, vector<8x8x384xf32>,
    %c8_i32 = arith.constant 8 : i32
    %12 = arith.muli %arg1, %c8_i32 : i32
    %c8_i32_10 = arith.constant 8 : i32
    %13 = arith.subi %c8_i32_10, %12 : i32
    %c8_i32_11 = arith.constant 8 : i32
    %14 = arith.minsi %c8_i32_11, %13 : i32
    %c0_12 = arith.constant 0 : index
    %c0_13 = arith.constant 0 : index
    %15 = vector.load %arg5[%c0_12, %c0_13] : memref<128x384xbf16, #tpu.memory_space<vmem>>, vector<128x384xbf16>
    %c0_14 = arith.constant 0 : index
    %c0_15 = arith.constant 0 : index
    %16 = vector.load %arg6[%c0_14, %c0_15] : memref<1x128xf32, #tpu.memory_space<vmem>>, vector<1x128xf32>
    %17 = vector.shape_cast %16 : vector<1x128xf32> to vector<1x128xf32>
    %18 = vector.broadcast %17 : vector<1x128xf32> to vector<8x128xf32>
    %c0_16 = arith.constant 0 : index
    %c0_17 = arith.constant 0 : index
    %19 = vector.load %arg12[%c0_16, %c0_17] : memref<8x128xf32, #tpu.memory_space<vmem>>, vector<8x128xf32>
    %c0_i32_18 = arith.constant 0 : i32
    %20 = arith.subi %14, %c0_i32_18 : i32
    %21 = arith.addi %c0_i32_18, %20 : i32
    %c1_i32 = arith.constant 1 : i32
    %22 = scf.for %arg14 = %c0_i32_18 to %21 step %c1_i32 iter_args(%arg15 = %19) -> (vector<8x128xf32>)  : i32 {
      %27 = arith.index_cast %arg14 : i32 to index
      %c0_23 = arith.constant 0 : index
      %c0_24 = arith.constant 0 : index
      %28 = vector.load %arg13[%27, %c0_23, %c0_24] : memref<8x8x384xf32, #tpu.memory_space<vmem>>, vector<1x8x384xf32>
      %29 = vector.shape_cast %28 : vector<1x8x384xf32> to vector<8x384xf32>
      %30 = arith.truncf %arg15 : vector<8x128xf32> to vector<8x128xbf16>
      %cst_25 = arith.constant dense<0.000000e+00> : vector<8x384xf32>
      %31 = tpu.matmul %30, %15, %cst_25 {dimension_numbers = #tpu.dot_dimension_numbers<[1], [0], [0], [1], [0, 0, 1, 1], [], []>} : vector<8x128xbf16>, vector<128x384xbf16>, vector<8x384xf32> -> vector<8x384xf32>
      %32 = vector.extract_strided_slice %29 {offsets = [0, 0], sizes = [8, 128], strides = [1, 1]} : vector<8x384xf32> to vector<8x128xf32>
      %33 = vector.extract_strided_slice %31 {offsets = [0, 0], sizes = [8, 128], strides = [1, 1]} : vector<8x384xf32> to vector<8x128xf32>
      %34 = arith.addf %32, %33 : vector<8x128xf32>
      %cst_26 = arith.constant 5.000000e-01 : f32
      %35 = vector.broadcast %cst_26 : f32 to vector<8x128xf32>
      %36 = arith.mulf %35, %34 : vector<8x128xf32>
      %37 = math.tanh %36 : vector<8x128xf32>
      %cst_27 = arith.constant 5.000000e-01 : f32
      %38 = vector.broadcast %cst_27 : f32 to vector<8x128xf32>
      %39 = arith.mulf %38, %37 : vector<8x128xf32>
      %cst_28 = arith.constant 5.000000e-01 : f32
      %40 = vector.broadcast %cst_28 : f32 to vector<8x128xf32>
      %41 = arith.addf %39, %40 : vector<8x128xf32>
      %42 = vector.extract_strided_slice %29 {offsets = [0, 128], sizes = [8, 128], strides = [1, 1]} : vector<8x384xf32> to vector<8x128xf32>
      %43 = vector.extract_strided_slice %31 {offsets = [0, 128], sizes = [8, 128], strides = [1, 1]} : vector<8x384xf32> to vector<8x128xf32>
      %44 = arith.addf %42, %43 : vector<8x128xf32>
      %cst_29 = arith.constant 5.000000e-01 : f32
      %45 = vector.broadcast %cst_29 : f32 to vector<8x128xf32>
      %46 = arith.mulf %45, %44 : vector<8x128xf32>
      %47 = math.tanh %46 : vector<8x128xf32>
      %cst_30 = arith.constant 5.000000e-01 : f32
      %48 = vector.broadcast %cst_30 : f32 to vector<8x128xf32>
      %49 = arith.mulf %48, %47 : vector<8x128xf32>
      %cst_31 = arith.constant 5.000000e-01 : f32
      %50 = vector.broadcast %cst_31 : f32 to vector<8x128xf32>
      %51 = arith.addf %49, %50 : vector<8x128xf32>
      %52 = vector.extract_strided_slice %29 {offsets = [0, 256], sizes = [8, 128], strides = [1, 1]} : vector<8x384xf32> to vector<8x128xf32>
      %53 = vector.extract_strided_slice %31 {offsets = [0, 256], sizes = [8, 128], strides = [1, 1]} : vector<8x384xf32> to vector<8x128xf32>
      %54 = arith.addf %53, %18 : vector<8x128xf32>
      %55 = arith.mulf %41, %54 : vector<8x128xf32>
      %56 = arith.addf %52, %55 : vector<8x128xf32>
      %57 = math.tanh %56 : vector<8x128xf32>
      %cst_32 = arith.constant 1.000000e+00 : f32
      %58 = vector.broadcast %cst_32 : f32 to vector<8x128xf32>
      %59 = arith.subf %58, %51 : vector<8x128xf32>
      %60 = arith.mulf %59, %57 : vector<8x128xf32>
      %61 = arith.mulf %51, %arg15 : vector<8x128xf32>
      %62 = arith.addf %60, %61 : vector<8x128xf32>
      scf.yield %62 : vector<8x128xf32>
    }
    %c0_19 = arith.constant 0 : index
    %c0_20 = arith.constant 0 : index
    %23 = vector.load %arg12[%c0_19, %c0_20] : memref<8x128xf32, #tpu.memory_space<vmem>>, vector<8x128xf32>
    tpu.vector_store %arg12[%c0_19, %c0_20], %22 {strides = array<i32>} : memref<8x128xf32, #tpu.memory_space<vmem>>, vector<8x128xf32>,
    %c0_i32_21 = arith.constant 0 : i32
    %24 = arith.cmpi eq, %arg1, %c0_i32_21 : i32
    %25 = arith.extui %24 : i1 to i32
    %c0_i32_22 = arith.constant 0 : i32
    %26 = arith.cmpi ne, %25, %c0_i32_22 : i32
    scf.if %26 {
      %c0_23 = arith.constant 0 : index
      %c0_24 = arith.constant 0 : index
      %27 = vector.load %arg12[%c0_23, %c0_24] : memref<8x128xf32, #tpu.memory_space<vmem>>, vector<8x128xf32>
      %c0_25 = arith.constant 0 : index
      %c0_26 = arith.constant 0 : index
      %28 = vector.load %arg7[%c0_25, %c0_26] : memref<128x128xf32, #tpu.memory_space<vmem>>, vector<128x128xf32>
      %cst_27 = arith.constant dense<0.000000e+00> : vector<8x128xf32>
      %29 = tpu.matmul %27, %28, %cst_27 {dimension_numbers = #tpu.dot_dimension_numbers<[1], [0], [0], [1], [0, 0, 1, 1], [], []>} : vector<8x128xf32>, vector<128x128xf32>, vector<8x128xf32> -> vector<8x128xf32>
      %c0_28 = arith.constant 0 : index
      %c0_29 = arith.constant 0 : index
      %30 = vector.load %arg8[%c0_28, %c0_29] : memref<1x128xf32, #tpu.memory_space<vmem>>, vector<1x128xf32>
      %31 = vector.broadcast %30 : vector<1x128xf32> to vector<8x128xf32>
      %32 = arith.addf %29, %31 : vector<8x128xf32>
      %cst_30 = arith.constant 0.000000e+00 : f32
      %33 = vector.broadcast %cst_30 : f32 to vector<8x128xf32>
      %34 = arith.maximumf %32, %33 : vector<8x128xf32>
      %c0_31 = arith.constant 0 : index
      %c0_32 = arith.constant 0 : index
      %35 = vector.load %arg9[%c0_31, %c0_32] : memref<1x128xf32, #tpu.memory_space<vmem>>, vector<1x128xf32>
      %36 = vector.broadcast %35 : vector<1x128xf32> to vector<8x128xf32>
      %37 = arith.mulf %34, %36 : vector<8x128xf32>
      %cst_33 = arith.constant dense<0.000000e+00> : vector<8xf32>
      %38 = vector.multi_reduction <add>, %37, %cst_33 [1] : vector<8x128xf32> to vector<8xf32>
      %39 = vector.shape_cast %38 : vector<8xf32> to vector<8x1xf32>
      %c0_34 = arith.constant 0 : index
      %c0_35 = arith.constant 0 : index
      %40 = memref.load %arg10[%c0_34, %c0_35] : memref<1x1xf32, #tpu.memory_space<smem>>
      %41 = vector.broadcast %40 : f32 to vector<8x1xf32>
      %42 = arith.addf %39, %41 : vector<8x1xf32>
      %cst_36 = arith.constant 5.000000e-01 : f32
      %43 = vector.broadcast %cst_36 : f32 to vector<8x1xf32>
      %44 = arith.mulf %43, %42 : vector<8x1xf32>
      %45 = math.tanh %44 : vector<8x1xf32>
      %cst_37 = arith.constant 5.000000e-01 : f32
      %46 = vector.broadcast %cst_37 : f32 to vector<8x1xf32>
      %47 = arith.mulf %46, %45 : vector<8x1xf32>
      %cst_38 = arith.constant 5.000000e-01 : f32
      %48 = vector.broadcast %cst_38 : f32 to vector<8x1xf32>
      %49 = arith.addf %47, %48 : vector<8x1xf32>
      %c0_39 = arith.constant 0 : index
      %c0_40 = arith.constant 0 : index
      %50 = vector.load %arg11[%c0_39, %c0_40] : memref<8x1xf32, #tpu.memory_space<vmem>>, vector<8x1xf32>
      tpu.vector_store %arg11[%c0_39, %c0_40], %49 {strides = array<i32>} : memref<8x1xf32, #tpu.memory_space<vmem>>, vector<8x1xf32>,
    } else {
    }
    return
  }
  func.func @transform_0(%arg0: i32, %arg1: i32) -> (i32, i32, i32) {
    %c0_i32 = arith.constant 0 : i32
    %c0_i32_0 = arith.constant 0 : i32
    return %arg1, %arg0, %c0_i32 : i32, i32, i32
  }
  func.func @transform_1(%arg0: i32, %arg1: i32) -> (i32, i32) {
    %c0_i32 = arith.constant 0 : i32
    %c0_i32_0 = arith.constant 0 : i32
    %c0_i32_1 = arith.constant 0 : i32
    return %c0_i32, %c0_i32_0 : i32, i32
  }
  func.func @transform_2(%arg0: i32, %arg1: i32) -> (i32, i32) {
    %c0_i32 = arith.constant 0 : i32
    %c0_i32_0 = arith.constant 0 : i32
    %c0_i32_1 = arith.constant 0 : i32
    return %c0_i32, %c0_i32_0 : i32, i32
  }
  func.func @transform_3(%arg0: i32, %arg1: i32) -> (i32, i32) {
    %c0_i32 = arith.constant 0 : i32
    %c0_i32_0 = arith.constant 0 : i32
    %c0_i32_1 = arith.constant 0 : i32
    return %c0_i32, %c0_i32_0 : i32, i32
  }
  func.func @transform_4(%arg0: i32, %arg1: i32) -> (i32, i32) {
    %c0_i32 = arith.constant 0 : i32
    %c0_i32_0 = arith.constant 0 : i32
    %c0_i32_1 = arith.constant 0 : i32
    return %c0_i32, %c0_i32_0 : i32, i32
  }
  func.func @transform_5(%arg0: i32, %arg1: i32) -> (i32, i32) {
    %c0_i32 = arith.constant 0 : i32
    %c0_i32_0 = arith.constant 0 : i32
    %c0_i32_1 = arith.constant 0 : i32
    return %c0_i32, %c0_i32_0 : i32, i32
  }
  func.func @transform_6(%arg0: i32, %arg1: i32) -> (i32, i32) {
    %c0_i32 = arith.constant 0 : i32
    %c0_i32_0 = arith.constant 0 : i32
    %c0_i32_1 = arith.constant 0 : i32
    return %c0_i32, %c0_i32_0 : i32, i32
  }
  func.func @transform_7(%arg0: i32, %arg1: i32) -> (i32, i32) {
    %c0_i32 = arith.constant 0 : i32
    %c0_i32_0 = arith.constant 0 : i32
    %c0_i32_1 = arith.constant 0 : i32
    return %c0_i32, %c0_i32_0 : i32, i32
  }
  func.func @transform_8(%arg0: i32, %arg1: i32) -> (i32, i32) {
    %c0_i32 = arith.constant 0 : i32
    %c0_i32_0 = arith.constant 0 : i32
    %c0_i32_1 = arith.constant 0 : i32
    return %c0_i32, %c0_i32_0 : i32, i32
  }
  func.func @transform_9(%arg0: i32, %arg1: i32) -> (i32, i32) {
    %c0_i32 = arith.constant 0 : i32
    %c0_i32_0 = arith.constant 0 : i32
    return %arg0, %c0_i32 : i32, i32
  }
}

</mosaic_0001>

<llo_original>
// kernel: gru_forward.1
$region0: #{gru_forward.1}
  #allocation0 [shape = 'u32[]', space=smem, size = 0x4, offset = 0x4, fixed_abs, tag = 'smem constant byte address 0x4 - core index']
  #allocation1 [shape = 'u32[144,128]{1,0:T(1,128)}', space=vmem, size = 0x12000, scoped, tag = 'internal scratch']
  #allocation2 [shape = 'f32[8,128]{1,0:T(8,128)}', space=vmem, size = 0x1000, scoped, tag = 'scratch operand']
  #allocation3 [shape = 'f32[8,8,384]{2,1,0:T(8,128)}', space=vmem, size = 0x18000, scoped, tag = 'scratch operand']
  #allocation4 [shape = 'f32[1,1]{1,0:T(1,128)S(6)}', space=smem, size = 0x200, scoped, tag = 'scoped memory for gru_forward.1']
  %s0 = inlined_call_operand.vmem [shape: f32[8,8,32], index: 0, kind: input, shape index: {}]
  %s1 = inlined_call_operand.vmem [shape: f32[32,384], index: 1, kind: input, shape index: {}]
  %s2 = inlined_call_operand.vmem [shape: f32[1,384], index: 2, kind: input, shape index: {}]
  %s3 = inlined_call_operand.vmem [shape: bf16[128,384], index: 3, kind: input, shape index: {}]
  %s4 = inlined_call_operand.vmem [shape: f32[1,128], index: 4, kind: input, shape index: {}]
  %s5 = inlined_call_operand.vmem [shape: f32[128,128], index: 5, kind: input, shape index: {}]
  %s6 = inlined_call_operand.vmem [shape: f32[1,128], index: 6, kind: input, shape index: {}]
  %s7 = inlined_call_operand.vmem [shape: f32[1,128], index: 7, kind: input, shape index: {}]
  %s8 = inlined_call_operand.<no memory space> [shape: f32[1,1], index: 8, kind: input, shape index: {}]
  %s9 = inlined_call_operand.vmem [shape: f32[8,1], index: 9, kind: output, shape index: {}]
  %s10 = sld [smem:[#allocation0]]
  $region61: #{gru_forward.1} parent=0
    _
  %s12 = ssub.s32 1, %s10
  %s13 = scalar_select 0, %s12, %s10
  %14 = sst [smem:[#allocation4]] %s8
  // Predicated region
  $region2: #{gru_forward.1} parent=0 // pred_check
    _
  $region3: #{gru_forward.1} parent=0 // pred_check_branch
    %16 = sbr.rel (0) target = $region5
  $region4: #{gru_forward.1} parent=0 // pred_region
    _
  $region5: #{gru_forward.1} parent=0 // pred_fallthru
    _
  // Predicated region
  $region6: #{gru_forward.1} parent=0 // pred_check
    _
  $region7: #{gru_forward.1} parent=0 // pred_check_branch
    %18 = sbr.rel (0) target = $region9
  $region8: #{gru_forward.1} parent=0 // pred_region
    _
  $region9: #{gru_forward.1} parent=0 // pred_fallthru
    _
  // Predicated region
  $region10: #{gru_forward.1} parent=0 // pred_check
    _
  $region11: #{gru_forward.1} parent=0 // pred_check_branch
    %20 = sbr.rel (0) target = $region13
  $region12: #{gru_forward.1} parent=0 // pred_region
    _
  $region13: #{gru_forward.1} parent=0 // pred_fallthru
    _
  // Predicated region
  $region14: #{gru_forward.1} parent=0 // pred_check
    _
  $region15: #{gru_forward.1} parent=0 // pred_check_branch
    %22 = sbr.rel (0) target = $region17
  $region16: #{gru_forward.1} parent=0 // pred_region
    _
  $region17: #{gru_forward.1} parent=0 // pred_fallthru
    _
  // Predicated region
  $region18: #{gru_forward.1} parent=0 // pred_check
    _
  $region19: #{gru_forward.1} parent=0 // pred_check_branch
    %24 = sbr.rel (0) target = $region21
  $region20: #{gru_forward.1} parent=0 // pred_region
    _
  $region21: #{gru_forward.1} parent=0 // pred_fallthru
    _
  // Predicated region
  $region22: #{gru_forward.1} parent=0 // pred_check
    _
  $region23: #{gru_forward.1} parent=0 // pred_check_branch
    %26 = sbr.rel (0) target = $region25
  $region24: #{gru_forward.1} parent=0 // pred_region
    _
  $region25: #{gru_forward.1} parent=0 // pred_fallthru
    _
  // Predicated region
  $region26: #{gru_forward.1} parent=0 // pred_check
    _
  $region27: #{gru_forward.1} parent=0 // pred_check_branch
    %28 = sbr.rel (0) target = $region29
  $region28: #{gru_forward.1} parent=0 // pred_region
    _
  $region29: #{gru_forward.1} parent=0 // pred_fallthru
    _
  // Predicated region
  $region30: #{gru_forward.1} parent=0 // pred_check
    _
  $region31: #{gru_forward.1} parent=0 // pred_check_branch
    %30 = sbr.rel (0) target = $region33
  $region32: #{gru_forward.1} parent=0 // pred_region
    _
  $region33: #{gru_forward.1} parent=0 // pred_fallthru
    _
  // Predicated region
  $region34: #{gru_forward.1} parent=0 // pred_check
    _
  $region35: #{gru_forward.1} parent=0 // pred_check_branch
    %32 = sbr.rel (0) target = $region37
  $region36: #{gru_forward.1} parent=0 // pred_region
    _
  $region37: #{gru_forward.1} parent=0 // pred_fallthru
    _
  %p34 = scmp.eq.s32.totalorder 0, 0
  // Predicated region
  $region38: #{gru_forward.1} parent=0 // pred_check
    %p35 = pneg %p34
  $region39: #{gru_forward.1} parent=0 // pred_check_branch
    %37 = sbr.rel (%p35) target = $region41
  $region40: #{gru_forward.1} parent=0 // pred_region
    %38 = vst [vmem:[#allocation2] sm:$0xff] 0.0
  $region41: #{gru_forward.1} parent=0 // pred_fallthru
    _
  %v39 = vld [vmem:[%s0] sm:$0xff]
  %v40 = vld [vmem:[%s0 + $0x8] sm:$0xff]
  %v41 = vld [vmem:[%s0 + $0x10] sm:$0xff]
  %v42 = vld [vmem:[%s0 + $0x18] sm:$0xff]
  %v43 = vld [vmem:[%s0 + $0x20] sm:$0xff]
  %v44 = vld [vmem:[%s0 + $0x28] sm:$0xff]
  %v45 = vld [vmem:[%s0 + $0x30] sm:$0xff]
  %v46 = vld [vmem:[%s0 + $0x38] sm:$0xff]
  %v47 = vld [vmem:[%s1] sm:$0xff]
  %v48 = vld [vmem:[%s1 + $0x8] sm:$0xff]
  %v49 = vld [vmem:[%s1 + $0x10] sm:$0xff]
  %v50 = vld [vmem:[%s1 + $0x18] sm:$0xff]
  %v51 = vld [vmem:[%s1 + $0x20] sm:$0xff]
  %v52 = vld [vmem:[%s1 + $0x28] sm:$0xff]
  %v53 = vld [vmem:[%s1 + $0x30] sm:$0xff]
  %v54 = vld [vmem:[%s1 + $0x38] sm:$0xff]
  %v55 = vld [vmem:[%s1 + $0x40] sm:$0xff]
  %v56 = vld [vmem:[%s1 + $0x48] sm:$0xff]
  %v57 = vld [vmem:[%s1 + $0x50] sm:$0xff]
  %v58 = vld [vmem:[%s1 + $0x58] sm:$0xff]
  %v59 = vld [vmem:[%s2] sm:$0x7]
  %v61 = vlaneseq
  %v62 = vshrl.u32 %v61, 7
  %v63 = vsub.s32 0, %v62
  %v64 = vrot.slane %v59, %v63
  %v65 = vlaneseq
  %v66 = vshrl.u32 %v65, 7
  %v67 = vsub.s32 1, %v66
  %v68 = vrot.slane %v59, %v67
  %v69 = vlaneseq
  %v70 = vshrl.u32 %v69, 7
  %v71 = vsub.s32 2, %v70
  %v72 = vrot.slane %v59, %v71
  %vm76 = vcmask 261120
  %v78 = vsel %vm76, %v39, 0
  %v81 = vsel %vm76, %v40, 0
  %v84 = vsel %vm76, %v41, 0
  %v87 = vsel %vm76, %v42, 0
  %v90 = vsel %vm76, %v43, 0
  %v93 = vsel %vm76, %v44, 0
  %v96 = vsel %vm76, %v45, 0
  %v99 = vsel %vm76, %v46, 0
  %101 = vmatprep.subr.mxu0 %v48
  %102 = vmatpush1.msra.mxu0 %v47
  %103 = vmatprep.subr.mxu0 %v51
  %104 = vmatpush1.msra.mxu0 %v50
  %105 = vmatprep.subr.mxu0 %v54
  %106 = vmatpush1.msra.mxu0 %v53
  %107 = vmatprep.subr.mxu0 %v57
  %108 = vmatpush1.msra.mxu0 %v56
  %109 = vmatprep.subr.mxu0 0.0
  %110 = vmatpush1.msra.mxu0 0.0
  %111 = vmatprep.subr.mxu0 0.0
  %112 = vmatpush1.msra.mxu0 0.0
  %113 = vmatprep.subr.mxu0 0.0
  %114 = vmatpush1.msra.mxu0 0.0
  %115 = vmatprep.subr.mxu0 0.0
  %116 = vmatpush1.msra.mxu0 0.0
  %117 = vmatprep.subr.mxu0 0.0
  %118 = vmatpush1.msra.mxu0 0.0
  %119 = vmatprep.subr.mxu0 0.0
  %120 = vmatpush1.msra.mxu0 0.0
  %121 = vmatprep.subr.mxu0 0.0
  %122 = vmatpush1.msra.mxu0 0.0
  %123 = vmatprep.subr.mxu0 0.0
  %124 = vmatpush1.msra.mxu0 0.0
  %125 = vmatprep.subr.mxu0 0.0
  %126 = vmatpush1.msra.mxu0 0.0
  %127 = vmatprep.subr.mxu0 0.0
  %128 = vmatpush1.msra.mxu0 0.0
  %129 = vmatprep.subr.mxu0 0.0
  %130 = vmatpush1.msra.mxu0 0.0
  %131 = vmatprep.subr.mxu0 0.0
  %132 = vmatpush1.msra.mxu0 0.0
  %133 = vmatprep.subr.mxu0 0.0
  %134 = vmatpush1.msra.mxu0 0.0
  %135 = vmatprep.subr.mxu0 0.0
  %136 = vmatpush1.msra.mxu0 0.0
  %137 = vmatprep.subr.mxu0 0.0
  %138 = vmatpush1.msra.mxu0 0.0
  %139 = vmatprep.subr.mxu0 0.0
  %140 = vmatpush1.msra.mxu0 0.0
  %141 = vmatprep.subr.mxu0 0.0
  %142 = vmatpush1.msra.mxu0 0.0
  %143 = vmatprep.subr.mxu0 0.0
  %144 = vmatpush1.msra.mxu0 0.0
  %145 = vmatprep.subr.mxu0 0.0
  %146 = vmatpush1.msra.mxu0 0.0
  %147 = vmatprep.subr.mxu0 0.0
  %148 = vmatpush1.msra.mxu0 0.0
  %149 = vmatprep.subr.mxu0 0.0
  %150 = vmatpush1.msra.mxu0 0.0
  %151 = vmatprep.subr.mxu0 0.0
  %152 = vmatpush1.msra.mxu0 0.0
  %153 = vmatprep.subr.mxu0 0.0
  %154 = vmatpush1.msra.mxu0 0.0
  %155 = vmatprep.subr.mxu0 0.0
  %156 = vmatpush1.msra.mxu0 0.0
  %157 = vmatprep.subr.mxu0 0.0
  %158 = vmatpush1.msra.mxu0 0.0
  %159 = vmatprep.subr.mxu0 0.0
  %160 = vmatpush1.msra.mxu0 0.0
  %161 = vmatprep.subr.mxu0 0.0
  %162 = vmatpush1.msra.mxu0 0.0
  %163 = vmatprep.subr.mxu0 0.0
  %164 = vmatpush1.msra.mxu0 0.0
  %165 = vmatprep.mubr.f32.mxu0 0.0
  %166 = vmatmul.mubr.f32.gmra.mrb[0].mxu0 %v78
  %v167 = vpop.f32.mrb[0].mxu0
  %v168 = vadd.f32 %v64, %v167
  %v169 = vpop.f32.mrb[0].mxu0
  %v170 = vadd.f32 %v68, %v169
  %171 = vmatprep.mubr.f32.mxu0 0.0
  %172 = vmatmul.mubr.f32.gmra.mrb[0].mxu0 %v81
  %v173 = vpop.f32.mrb[0].mxu0
  %v174 = vadd.f32 %v64, %v173
  %v175 = vpop.f32.mrb[0].mxu0
  %v176 = vadd.f32 %v68, %v175
  %177 = vmatprep.mubr.f32.mxu0 0.0
  %178 = vmatmul.mubr.f32.gmra.mrb[0].mxu0 %v84
  %v179 = vpop.f32.mrb[0].mxu0
  %v180 = vadd.f32 %v64, %v179
  %v181 = vpop.f32.mrb[0].mxu0
  %v182 = vadd.f32 %v68, %v181
  %183 = vmatprep.mubr.f32.mxu0 0.0
  %184 = vmatmul.mubr.f32.gmra.mrb[0].mxu0 %v87
  %v185 = vpop.f32.mrb[0].mxu0
  %v186 = vadd.f32 %v64, %v185
  %v187 = vpop.f32.mrb[0].mxu0
  %v188 = vadd.f32 %v68, %v187
  %189 = vmatprep.mubr.f32.mxu0 0.0
  %190 = vmatmul.mubr.f32.gmra.mrb[0].mxu0 %v90
  %v191 = vpop.f32.mrb[0].mxu0
  %v192 = vadd.f32 %v64, %v191
  %v193 = vpop.f32.mrb[0].mxu0
  %v194 = vadd.f32 %v68, %v193
  %195 = vmatprep.mubr.f32.mxu0 0.0
  %196 = vmatmul.mubr.f32.gmra.mrb[0].mxu0 %v93
  %v197 = vpop.f32.mrb[0].mxu0
  %v198 = vadd.f32 %v64, %v197
  %v199 = vpop.f32.mrb[0].mxu0
  %v200 = vadd.f32 %v68, %v199
  %201 = vmatprep.mubr.f32.mxu0 0.0
  %202 = vmatmul.mubr.f32.gmra.mrb[0].mxu0 %v96
  %v203 = vpop.f32.mrb[0].mxu0
  %v204 = vadd.f32 %v64, %v203
  %v205 = vpop.f32.mrb[0].mxu0
  %v206 = vadd.f32 %v68, %v205
  %207 = vmatprep.mubr.f32.mxu0 0.0
  %208 = vmatmul.mubr.f32.gmra.mrb[0].mxu0 %v99
  %v209 = vpop.f32.mrb[0].mxu0
  %v210 = vadd.f32 %v64, %v209
  %v211 = vpop.f32.mrb[0].mxu0
  %v212 = vadd.f32 %v68, %v211
  %213 = vdwg.mxu0
  %214 = vmatprep.subr.mxu0 0.0
  %215 = vmatpush1.msra.mxu0 %v49
  %216 = vmatprep.subr.mxu0 0.0
  %217 = vmatpush1.msra.mxu0 %v52
  %218 = vmatprep.subr.mxu0 0.0
  %219 = vmatpush1.msra.mxu0 %v55
  %220 = vmatprep.subr.mxu0 0.0
  %221 = vmatpush1.msra.mxu0 %v58
  %222 = vmatprep.subr.mxu0 0.0
  %223 = vmatpush1.msra.mxu0 0.0
  %224 = vmatprep.subr.mxu0 0.0
  %225 = vmatpush1.msra.mxu0 0.0
  %226 = vmatprep.subr.mxu0 0.0
  %227 = vmatpush1.msra.mxu0 0.0
  %228 = vmatprep.subr.mxu0 0.0
  %229 = vmatpush1.msra.mxu0 0.0
  %230 = vmatprep.subr.mxu0 0.0
  %231 = vmatpush1.msra.mxu0 0.0
  %232 = vmatprep.subr.mxu0 0.0
  %233 = vmatpush1.msra.mxu0 0.0
  %234 = vmatprep.subr.mxu0 0.0
  %235 = vmatpush1.msra.mxu0 0.0
  %236 = vmatprep.subr.mxu0 0.0
  %237 = vmatpush1.msra.mxu0 0.0
  %238 = vmatprep.subr.mxu0 0.0
  %239 = vmatpush1.msra.mxu0 0.0
  %240 = vmatprep.subr.mxu0 0.0
  %241 = vmatpush1.msra.mxu0 0.0
  %242 = vmatprep.subr.mxu0 0.0
  %243 = vmatpush1.msra.mxu0 0.0
  %244 = vmatprep.subr.mxu0 0.0
  %245 = vmatpush1.msra.mxu0 0.0
  %246 = vmatprep.subr.mxu0 0.0
  %247 = vmatpush1.msra.mxu0 0.0
  %248 = vmatprep.subr.mxu0 0.0
  %249 = vmatpush1.msra.mxu0 0.0
  %250 = vmatprep.subr.mxu0 0.0
  %251 = vmatpush1.msra.mxu0 0.0
  %252 = vmatprep.subr.mxu0 0.0
  %253 = vmatpush1.msra.mxu0 0.0
  %254 = vmatprep.subr.mxu0 0.0
  %255 = vmatpush1.msra.mxu0 0.0
  %256 = vmatprep.subr.mxu0 0.0
  %257 = vmatpush1.msra.mxu0 0.0
  %258 = vmatprep.subr.mxu0 0.0
  %259 = vmatpush1.msra.mxu0 0.0
  %260 = vmatprep.subr.mxu0 0.0
  %261 = vmatpush1.msra.mxu0 0.0
  %262 = vmatprep.subr.mxu0 0.0
  %263 = vmatpush1.msra.mxu0 0.0
  %264 = vmatprep.subr.mxu0 0.0
  %265 = vmatpush1.msra.mxu0 0.0
  %266 = vmatprep.subr.mxu0 0.0
  %267 = vmatpush1.msra.mxu0 0.0
  %268 = vmatprep.subr.mxu0 0.0
  %269 = vmatpush1.msra.mxu0 0.0
  %270 = vmatprep.subr.mxu0 0.0
  %271 = vmatpush1.msra.mxu0 0.0
  %272 = vmatprep.subr.mxu0 0.0
  %273 = vmatpush1.msra.mxu0 0.0
  %274 = vmatprep.subr.mxu0 0.0
  %275 = vmatpush1.msra.mxu0 0.0
  %276 = vmatprep.subr.mxu0 0.0
  %277 = vmatpush1.msra.mxu0 0.0
  %278 = vmatprep.mubr.f32.mxu0 0.0
  %279 = vmatmul.mubr.f32.gmra.mrb[0].mxu0 %v78
  %v280 = vpop.f32.mrb[0].mxu0
  %v281 = vadd.f32 %v72, %v280
  %v282 = vpop.f32.mrb[0].mxu0
  %283 = vmatprep.mubr.f32.mxu0 0.0
  %284 = vmatmul.mubr.f32.gmra.mrb[0].mxu0 %v81
  %v285 = vpop.f32.mrb[0].mxu0
  %v286 = vadd.f32 %v72, %v285
  %v287 = vpop.f32.mrb[0].mxu0
  %288 = vmatprep.mubr.f32.mxu0 0.0
  %289 = vmatmul.mubr.f32.gmra.mrb[0].mxu0 %v84
  %v290 = vpop.f32.mrb[0].mxu0
  %v291 = vadd.f32 %v72, %v290
  %v292 = vpop.f32.mrb[0].mxu0
  %293 = vmatprep.mubr.f32.mxu0 0.0
  %294 = vmatmul.mubr.f32.gmra.mrb[0].mxu0 %v87
  %v295 = vpop.f32.mrb[0].mxu0
  %v296 = vadd.f32 %v72, %v295
  %v297 = vpop.f32.mrb[0].mxu0
  %298 = vmatprep.mubr.f32.mxu0 0.0
  %299 = vmatmul.mubr.f32.gmra.mrb[0].mxu0 %v90
  %v300 = vpop.f32.mrb[0].mxu0
  %v301 = vadd.f32 %v72, %v300
  %v302 = vpop.f32.mrb[0].mxu0
  %303 = vmatprep.mubr.f32.mxu0 0.0
  %304 = vmatmul.mubr.f32.gmra.mrb[0].mxu0 %v93
  %v305 = vpop.f32.mrb[0].mxu0
  %v306 = vadd.f32 %v72, %v305
  %v307 = vpop.f32.mrb[0].mxu0
  %308 = vmatprep.mubr.f32.mxu0 0.0
  %309 = vmatmul.mubr.f32.gmra.mrb[0].mxu0 %v96
  %v310 = vpop.f32.mrb[0].mxu0
  %v311 = vadd.f32 %v72, %v310
  %v312 = vpop.f32.mrb[0].mxu0
  %313 = vmatprep.mubr.f32.mxu0 0.0
  %314 = vmatmul.mubr.f32.gmra.mrb[0].mxu0 %v99
  %v315 = vpop.f32.mrb[0].mxu0
  %v316 = vadd.f32 %v72, %v315
  %v317 = vpop.f32.mrb[0].mxu0
  %318 = vdwg.mxu0
  %319 = vst [vmem:[#allocation3] sm:$0xff] %v168
  %320 = vst [vmem:[#allocation3 + $0x8] sm:$0xff] %v170
  %321 = vst [vmem:[#allocation3 + $0x10] sm:$0xff] %v281
  %322 = vst [vmem:[#allocation3 + $0x18] sm:$0xff] %v174
  %323 = vst [vmem:[#allocation3 + $0x20] sm:$0xff] %v176
  %324 = vst [vmem:[#allocation3 + $0x28] sm:$0xff] %v286
  %325 = vst [vmem:[#allocation3 + $0x30] sm:$0xff] %v180
  %326 = vst [vmem:[#allocation3 + $0x38] sm:$0xff] %v182
  %327 = vst [vmem:[#allocation3 + $0x40] sm:$0xff] %v291
  %328 = vst [vmem:[#allocation3 + $0x48] sm:$0xff] %v186
  %329 = vst [vmem:[#allocation3 + $0x50] sm:$0xff] %v188
  %330 = vst [vmem:[#allocation3 + $0x58] sm:$0xff] %v296
  %331 = vst [vmem:[#allocation3 + $0x60] sm:$0xff] %v192
  %332 = vst [vmem:[#allocation3 + $0x68] sm:$0xff] %v194
  %333 = vst [vmem:[#allocation3 + $0x70] sm:$0xff] %v301
  %334 = vst [vmem:[#allocation3 + $0x78] sm:$0xff] %v198
  %335 = vst [vmem:[#allocation3 + $0x80] sm:$0xff] %v200
  %336 = vst [vmem:[#allocation3 + $0x88] sm:$0xff] %v306
  %337 = vst [vmem:[#allocation3 + $0x90] sm:$0xff] %v204
  %338 = vst [vmem:[#allocation3 + $0x98] sm:$0xff] %v206
  %339 = vst [vmem:[#allocation3 + $0xa0] sm:$0xff] %v311
  %340 = vst [vmem:[#allocation3 + $0xa8] sm:$0xff] %v210
  %341 = vst [vmem:[#allocation3 + $0xb0] sm:$0xff] %v212
  %342 = vst [vmem:[#allocation3 + $0xb8] sm:$0xff] %v316
  %s343 = smul.u32 0, 8
  %s344 = ssub.s32 8, %s343
  %p345 = scmp.lt.s32.totalorder %s344, 8
  %s346 = scalar_select %p345, %s344, 8
  %v347 = vld [vmem:[%s3] sm:$0xff]
  %v348 = vld [vmem:[%s3 + $0x8] sm:$0xf]
  %v349 = vld [vmem:[%s3 + $0xc] sm:$0xff]
  %v350 = vld [vmem:[%s3 + $0x14] sm:$0xf]
  %v351 = vld [vmem:[%s3 + $0x18] sm:$0xff]
  %v352 = vld [vmem:[%s3 + $0x20] sm:$0xf]
  %v353 = vld [vmem:[%s3 + $0x24] sm:$0xff]
  %v354 = vld [vmem:[%s3 + $0x2c] sm:$0xf]
  %v355 = vld [vmem:[%s3 + $0x30] sm:$0xff]
  %v356 = vld [vmem:[%s3 + $0x38] sm:$0xf]
  %v357 = vld [vmem:[%s3 + $0x3c] sm:$0xff]
  %v358 = vld [vmem:[%s3 + $0x44] sm:$0xf]
  %v359 = vld [vmem:[%s3 + $0x48] sm:$0xff]
  %v360 = vld [vmem:[%s3 + $0x50] sm:$0xf]
  %v361 = vld [vmem:[%s3 + $0x54] sm:$0xff]
  %v362 = vld [vmem:[%s3 + $0x5c] sm:$0xf]
  %v363 = vld [vmem:[%s3 + $0x60] sm:$0xff]
  %v364 = vld [vmem:[%s3 + $0x68] sm:$0xf]
  %v365 = vld [vmem:[%s3 + $0x6c] sm:$0xff]
  %v366 = vld [vmem:[%s3 + $0x74] sm:$0xf]
  %v367 = vld [vmem:[%s3 + $0x78] sm:$0xff]
  %v368 = vld [vmem:[%s3 + $0x80] sm:$0xf]
  %v369 = vld [vmem:[%s3 + $0x84] sm:$0xff]
  %v370 = vld [vmem:[%s3 + $0x8c] sm:$0xf]
  %v371 = vld [vmem:[%s3 + $0x90] sm:$0xff]
  %v372 = vld [vmem:[%s3 + $0x98] sm:$0xf]
  %v373 = vld [vmem:[%s3 + $0x9c] sm:$0xff]
  %v374 = vld [vmem:[%s3 + $0xa4] sm:$0xf]
  %v375 = vld [vmem:[%s3 + $0xa8] sm:$0xff]
  %v376 = vld [vmem:[%s3 + $0xb0] sm:$0xf]
  %v377 = vld [vmem:[%s3 + $0xb4] sm:$0xff]
  %v378 = vld [vmem:[%s3 + $0xbc] sm:$0xf]
  %v379 = vld [vmem:[%s4] sm:$0x1]
  %v381 = vlaneseq
  %v382 = vshrl.u32 %v381, 7
  %v383 = vsub.s32 0, %v382
  %v384 = vrot.slane %v379, %v383
  %v386 = vld [vmem:[#allocation2] sm:$0xff]
  // While loop
  $region42: #{gru_forward.1} parent=0 // loop_pre_header
    _
  $region43: #{gru_forward.1} parent=0 // loop_header
    %s388 = sphi 0, %s390
    %p389 = scmp.ge.s32.totalorder %s388, %s346
    %v393 = vphi %v386, %v627
  $region44: #{gru_forward.1} parent=0 // loop_header_branch
    %392 = sbr.rel (%p389) target = $region48
  $region45: #{gru_forward.1} parent=0 // loop_body
    %s394 = smul.u32 %s388, 3
    %s395 = smul.addr %s394, 8
    %s396 = scalar_lea.vmem [#allocation3], %s395
    %v397 = vld [vmem:[%s396] sm:$0xff]
    %v398 = vld [vmem:[%s396 + $0x8] sm:$0xff]
    %v399 = vld [vmem:[%s396 + $0x10] sm:$0xff]
    %v400 = vpack.c.bf16 %v393, %v393
    %v433 = vunpack.c.l.b16 %v347
    %v434 = vunpack.c.h.b16 %v347
    %v435 = vunpack.c.l.b16 %v348
    %v436 = vunpack.c.l.b16 %v349
    %v437 = vunpack.c.h.b16 %v349
    %v438 = vunpack.c.l.b16 %v350
    %v439 = vunpack.c.l.b16 %v351
    %v440 = vunpack.c.h.b16 %v351
    %v441 = vunpack.c.l.b16 %v352
    %v442 = vunpack.c.l.b16 %v353
    %v443 = vunpack.c.h.b16 %v353
    %v444 = vunpack.c.l.b16 %v354
    %v445 = vunpack.c.l.b16 %v355
    %v446 = vunpack.c.h.b16 %v355
    %v447 = vunpack.c.l.b16 %v356
    %v448 = vunpack.c.l.b16 %v357
    %v449 = vunpack.c.h.b16 %v357
    %v450 = vunpack.c.l.b16 %v358
    %v451 = vunpack.c.l.b16 %v359
    %v452 = vunpack.c.h.b16 %v359
    %v453 = vunpack.c.l.b16 %v360
    %v454 = vunpack.c.l.b16 %v361
    %v455 = vunpack.c.h.b16 %v361
    %v456 = vunpack.c.l.b16 %v362
    %v457 = vunpack.c.l.b16 %v363
    %v458 = vunpack.c.h.b16 %v363
    %v459 = vunpack.c.l.b16 %v364
    %v460 = vunpack.c.l.b16 %v365
    %v461 = vunpack.c.h.b16 %v365
    %v462 = vunpack.c.l.b16 %v366
    %v463 = vunpack.c.l.b16 %v367
    %v464 = vunpack.c.h.b16 %v367
    %v465 = vunpack.c.l.b16 %v368
    %v466 = vunpack.c.l.b16 %v369
    %v467 = vunpack.c.h.b16 %v369
    %v468 = vunpack.c.l.b16 %v370
    %v469 = vunpack.c.l.b16 %v371
    %v470 = vunpack.c.h.b16 %v371
    %v471 = vunpack.c.l.b16 %v372
    %v472 = vunpack.c.l.b16 %v373
    %v473 = vunpack.c.h.b16 %v373
    %v474 = vunpack.c.l.b16 %v374
    %v475 = vunpack.c.l.b16 %v375
    %v476 = vunpack.c.h.b16 %v375
    %v477 = vunpack.c.l.b16 %v376
    %v478 = vunpack.c.l.b16 %v377
    %v479 = vunpack.c.h.b16 %v377
    %v480 = vunpack.c.l.b16 %v378
    %v481 = vpack.c.b16 %v436, %v433
    %v482 = vpack.c.b16 %v437, %v434
    %v483 = vpack.c.b16 %v438, %v435
    %v484 = vpack.c.b16 %v442, %v439
    %v485 = vpack.c.b16 %v443, %v440
    %v486 = vpack.c.b16 %v444, %v441
    %v487 = vpack.c.b16 %v448, %v445
    %v488 = vpack.c.b16 %v449, %v446
    %v489 = vpack.c.b16 %v450, %v447
    %v490 = vpack.c.b16 %v454, %v451
    %v491 = vpack.c.b16 %v455, %v452
    %v492 = vpack.c.b16 %v456, %v453
    %v493 = vpack.c.b16 %v460, %v457
    %v494 = vpack.c.b16 %v461, %v458
    %v495 = vpack.c.b16 %v462, %v459
    %v496 = vpack.c.b16 %v466, %v463
    %v497 = vpack.c.b16 %v467, %v464
    %v498 = vpack.c.b16 %v468, %v465
    %v499 = vpack.c.b16 %v472, %v469
    %v500 = vpack.c.b16 %v473, %v470
    %v501 = vpack.c.b16 %v474, %v471
    %v502 = vpack.c.b16 %v478, %v475
    %v503 = vpack.c.b16 %v479, %v476
    %v504 = vpack.c.b16 %v480, %v477
    %529 = vmatprep.subr.bf16.mxu0 %v482
    %530 = vmatpush1.bf16.msra.mxu0 %v481
    %531 = vmatprep.subr.bf16.mxu0 %v485
    %532 = vmatpush1.bf16.msra.mxu0 %v484
    %533 = vmatprep.subr.bf16.mxu0 %v488
    %534 = vmatpush1.bf16.msra.mxu0 %v487
    %535 = vmatprep.subr.bf16.mxu0 %v491
    %536 = vmatpush1.bf16.msra.mxu0 %v490
    %537 = vmatprep.subr.bf16.mxu0 %v494
    %538 = vmatpush1.bf16.msra.mxu0 %v493
    %539 = vmatprep.subr.bf16.mxu0 %v497
    %540 = vmatpush1.bf16.msra.mxu0 %v496
    %541 = vmatprep.subr.bf16.mxu0 %v500
    %542 = vmatpush1.bf16.msra.mxu0 %v499
    %543 = vmatprep.subr.bf16.mxu0 %v503
    %544 = vmatpush1.bf16.msra.mxu0 %v502
    %545 = vmatprep.subr.bf16.mxu0 0
    %546 = vmatpush1.bf16.msra.mxu0 0
    %547 = vmatprep.subr.bf16.mxu0 0
    %548 = vmatpush1.bf16.msra.mxu0 0
    %549 = vmatprep.subr.bf16.mxu0 0
    %550 = vmatpush1.bf16.msra.mxu0 0
    %551 = vmatprep.subr.bf16.mxu0 0
    %552 = vmatpush1.bf16.msra.mxu0 0
    %553 = vmatprep.subr.bf16.mxu0 0
    %554 = vmatpush1.bf16.msra.mxu0 0
    %555 = vmatprep.subr.bf16.mxu0 0
    %556 = vmatpush1.bf16.msra.mxu0 0
    %557 = vmatprep.subr.bf16.mxu0 0
    %558 = vmatpush1.bf16.msra.mxu0 0
    %559 = vmatprep.subr.bf16.mxu0 0
    %560 = vmatpush1.bf16.msra.mxu0 0
    %561 = vmatprep.mubr.bf16.mxu0 0
    %562 = vmatmul.mubr.bf16.gmra.mrb[0].mxu0 %v400
    %v563 = vpop.f32.mrb[0].mxu0
    %v564 = vadd.f32 0.0, %v563
    %v565 = vpop.f32.mrb[0].mxu0
    %v566 = vadd.f32 0.0, %v565
    %v567 = vpop.f32.mrb[0].mxu0
    %v568 = vpop.f32.mrb[0].mxu0
    %569 = vdwg.mxu0
    %570 = vmatprep.subr.bf16.mxu0 0
    %571 = vmatpush1.bf16.msra.mxu0 %v483
    %572 = vmatprep.subr.bf16.mxu0 0
    %573 = vmatpush1.bf16.msra.mxu0 %v486
    %574 = vmatprep.subr.bf16.mxu0 0
    %575 = vmatpush1.bf16.msra.mxu0 %v489
    %576 = vmatprep.subr.bf16.mxu0 0
    %577 = vmatpush1.bf16.msra.mxu0 %v492
    %578 = vmatprep.subr.bf16.mxu0 0
    %579 = vmatpush1.bf16.msra.mxu0 %v495
    %580 = vmatprep.subr.bf16.mxu0 0
    %581 = vmatpush1.bf16.msra.mxu0 %v498
    %582 = vmatprep.subr.bf16.mxu0 0
    %583 = vmatpush1.bf16.msra.mxu0 %v501
    %584 = vmatprep.subr.bf16.mxu0 0
    %585 = vmatpush1.bf16.msra.mxu0 %v504
    %586 = vmatprep.subr.bf16.mxu0 0
    %587 = vmatpush1.bf16.msra.mxu0 0
    %588 = vmatprep.subr.bf16.mxu0 0
    %589 = vmatpush1.bf16.msra.mxu0 0
    %590 = vmatprep.subr.bf16.mxu0 0
    %591 = vmatpush1.bf16.msra.mxu0 0
    %592 = vmatprep.subr.bf16.mxu0 0
    %593 = vmatpush1.bf16.msra.mxu0 0
    %594 = vmatprep.subr.bf16.mxu0 0
    %595 = vmatpush1.bf16.msra.mxu0 0
    %596 = vmatprep.subr.bf16.mxu0 0
    %597 = vmatpush1.bf16.msra.mxu0 0
    %598 = vmatprep.subr.bf16.mxu0 0
    %599 = vmatpush1.bf16.msra.mxu0 0
    %600 = vmatprep.subr.bf16.mxu0 0
    %601 = vmatpush1.bf16.msra.mxu0 0
    %602 = vmatprep.mubr.bf16.mxu0 0
    %603 = vmatmul.mubr.bf16.gmra.mrb[0].mxu0 %v400
    %v604 = vpop.f32.mrb[0].mxu0
    %v605 = vadd.f32 0.0, %v604
    %v606 = vpop.f32.mrb[0].mxu0
    %v607 = vpop.f32.mrb[0].mxu0
    %v608 = vpop.f32.mrb[0].mxu0
    %609 = vdwg.mxu0
    %v610 = vadd.f32 %v397, %v564
    %v611 = vmul.f32 %v610, 0.5
    %v612 = vtanh.pop %v611
    %v613 = vmul.f32 %v612, 0.5
    %v614 = vadd.f32 %v613, 0.5
    %v615 = vadd.f32 %v398, %v566
    %v616 = vmul.f32 %v615, 0.5
    %v617 = vtanh.pop %v616
    %v618 = vmul.f32 %v617, 0.5
    %v619 = vadd.f32 %v618, 0.5
    %v620 = vadd.f32 %v605, %v384
    %v621 = vmul.f32 %v614, %v620
    %v622 = vadd.f32 %v399, %v621
    %v623 = vtanh.pop %v622
    %v624 = vsub.f32 1.0, %v619
    %v625 = vmul.f32 %v624, %v623
    %v626 = vmul.f32 %v619, %v393
    %v627 = vadd.f32 %v625, %v626
  $region46: #{gru_forward.1} parent=0 // loop_footer
    %s390 = sadd.s32 %s388, 1
  $region47: #{gru_forward.1} parent=0 // loop_footer_branch
    %387 = sbr.rel target = $region43
  $region48: #{gru_forward.1} parent=0 // loop_exit
    _
  %628 = vst [vmem:[#allocation2] sm:$0xff] %v393
  // Predicated region
  $region49: #{gru_forward.1} parent=0 // pred_check
    %p629 = pneg %p34
  $region50: #{gru_forward.1} parent=0 // pred_check_branch
    %631 = sbr.rel (%p629) target = $region52
  $region51: #{gru_forward.1} parent=0 // pred_region
    %v632 = vld [vmem:[#allocation2] sm:$0xff]
    %v633 = vld [vmem:[%s5] sm:$0xff]
    %v634 = vld [vmem:[%s5 + $0x8] sm:$0xff]
    %v635 = vld [vmem:[%s5 + $0x10] sm:$0xff]
    %v636 = vld [vmem:[%s5 + $0x18] sm:$0xff]
    %v637 = vld [vmem:[%s5 + $0x20] sm:$0xff]
    %v638 = vld [vmem:[%s5 + $0x28] sm:$0xff]
    %v639 = vld [vmem:[%s5 + $0x30] sm:$0xff]
    %v640 = vld [vmem:[%s5 + $0x38] sm:$0xff]
    %v641 = vld [vmem:[%s5 + $0x40] sm:$0xff]
    %v642 = vld [vmem:[%s5 + $0x48] sm:$0xff]
    %v643 = vld [vmem:[%s5 + $0x50] sm:$0xff]
    %v644 = vld [vmem:[%s5 + $0x58] sm:$0xff]
    %v645 = vld [vmem:[%s5 + $0x60] sm:$0xff]
    %v646 = vld [vmem:[%s5 + $0x68] sm:$0xff]
    %v647 = vld [vmem:[%s5 + $0x70] sm:$0xff]
    %v648 = vld [vmem:[%s5 + $0x78] sm:$0xff]
    %v649 = vld [vmem:[%s6] sm:$0x1]
    %v651 = vlaneseq
    %v652 = vshrl.u32 %v651, 7
    %v653 = vsub.s32 0, %v652
    %v654 = vrot.slane %v649, %v653
    %656 = vmatprep.subr.mxu0 0.0
    %657 = vmatpush1.msra.mxu0 %v633
    %658 = vmatprep.subr.mxu0 0.0
    %659 = vmatpush1.msra.mxu0 %v634
    %660 = vmatprep.subr.mxu0 0.0
    %661 = vmatpush1.msra.mxu0 %v635
    %662 = vmatprep.subr.mxu0 0.0
    %663 = vmatpush1.msra.mxu0 %v636
    %664 = vmatprep.subr.mxu0 0.0
    %665 = vmatpush1.msra.mxu0 %v637
    %666 = vmatprep.subr.mxu0 0.0
    %667 = vmatpush1.msra.mxu0 %v638
    %668 = vmatprep.subr.mxu0 0.0
    %669 = vmatpush1.msra.mxu0 %v639
    %670 = vmatprep.subr.mxu0 0.0
    %671 = vmatpush1.msra.mxu0 %v640
    %672 = vmatprep.subr.mxu0 0.0
    %673 = vmatpush1.msra.mxu0 %v641
    %674 = vmatprep.subr.mxu0 0.0
    %675 = vmatpush1.msra.mxu0 %v642
    %676 = vmatprep.subr.mxu0 0.0
    %677 = vmatpush1.msra.mxu0 %v643
    %678 = vmatprep.subr.mxu0 0.0
    %679 = vmatpush1.msra.mxu0 %v644
    %680 = vmatprep.subr.mxu0 0.0
    %681 = vmatpush1.msra.mxu0 %v645
    %682 = vmatprep.subr.mxu0 0.0
    %683 = vmatpush1.msra.mxu0 %v646
    %684 = vmatprep.subr.mxu0 0.0
    %685 = vmatpush1.msra.mxu0 %v647
    %686 = vmatprep.subr.mxu0 0.0
    %687 = vmatpush1.msra.mxu0 %v648
    %688 = vmatprep.subr.mxu0 0.0
    %689 = vmatpush1.msra.mxu0 0.0
    %690 = vmatprep.subr.mxu0 0.0
    %691 = vmatpush1.msra.mxu0 0.0
    %692 = vmatprep.subr.mxu0 0.0
    %693 = vmatpush1.msra.mxu0 0.0
    %694 = vmatprep.subr.mxu0 0.0
    %695 = vmatpush1.msra.mxu0 0.0
    %696 = vmatprep.subr.mxu0 0.0
    %697 = vmatpush1.msra.mxu0 0.0
    %698 = vmatprep.subr.mxu0 0.0
    %699 = vmatpush1.msra.mxu0 0.0
    %700 = vmatprep.subr.mxu0 0.0
    %701 = vmatpush1.msra.mxu0 0.0
    %702 = vmatprep.subr.mxu0 0.0
    %703 = vmatpush1.msra.mxu0 0.0
    %704 = vmatprep.subr.mxu0 0.0
    %705 = vmatpush1.msra.mxu0 0.0
    %706 = vmatprep.subr.mxu0 0.0
    %707 = vmatpush1.msra.mxu0 0.0
    %708 = vmatprep.subr.mxu0 0.0
    %709 = vmatpush1.msra.mxu0 0.0
    %710 = vmatprep.subr.mxu0 0.0
    %711 = vmatpush1.msra.mxu0 0.0
    %712 = vmatprep.subr.mxu0 0.0
    %713 = vmatpush1.msra.mxu0 0.0
    %714 = vmatprep.subr.mxu0 0.0
    %715 = vmatpush1.msra.mxu0 0.0
    %716 = vmatprep.subr.mxu0 0.0
    %717 = vmatpush1.msra.mxu0 0.0
    %718 = vmatprep.subr.mxu0 0.0
    %719 = vmatpush1.msra.mxu0 0.0
    %720 = vmatprep.mubr.f32.mxu0 0.0
    %721 = vmatmul.mubr.f32.gmra.mrb[0].mxu0 %v632
    %v722 = vpop.f32.mrb[0].mxu0
    %v723 = vadd.f32 %v654, %v722
    %v724 = vpop.f32.mrb[0].mxu0
    %725 = vdwg.mxu0
    %v726 = vmax.f32 %v723, 0.0
    %v727 = vld [vmem:[%s7] sm:$0x1]
    %v729 = vlaneseq
    %v730 = vshrl.u32 %v729, 7
    %v731 = vsub.s32 0, %v730
    %v732 = vrot.slane %v727, %v731
    %v734 = vmul.f32 %v726, %v732
    %735 = vadd.xlane.f32.xlu0 %v734
    %v736 = vpop.xlane.xlu0 %735
    %s737 = sld [smem:[#allocation4]]
    %v738 = vstv %s737
    %v739 = vadd.f32 %v736, %v738
    %v740 = vmul.f32 %v739, 0.5
    %v741 = vtanh.pop %v740
    %v742 = vmul.f32 %v741, 0.5
    %v743 = vadd.f32 %v742, 0.5
    %vm744 = vcmask 7168
    %745 = vst.msk [vmem:[%s9] sm:$0xff] %vm744, %v743
  $region52: #{gru_forward.1} parent=0 // pred_fallthru
    _
  // Predicated region
  $region53: #{gru_forward.1} parent=0 // pred_check
    _
  $region54: #{gru_forward.1} parent=0 // pred_check_branch
    %747 = sbr.rel (0) target = $region56
  $region55: #{gru_forward.1} parent=0 // pred_region
    _
  $region56: #{gru_forward.1} parent=0 // pred_fallthru
    _
  // Predicated region
  $region57: #{gru_forward.1} parent=0 // pred_check
    _
  $region58: #{gru_forward.1} parent=0 // pred_check_branch
    %749 = sbr.rel (0) target = $region60
  $region59: #{gru_forward.1} parent=0 // pred_region
    _
  $region60: #{gru_forward.1} parent=0 // pred_fallthru
    _

</llo_original>
